<compile_context>
chip_gen: v7x
topology: tpu7x:2x2x1
jax: 0.10.0
libtpu: 0.0.40
codegen_flags: <defaults>
</compile_context>

<pallas_src>
import math

import jax
import jax.numpy as jnp
from jax.experimental import pallas as pl
from jax.experimental.pallas import tpu as pltpu


def _layer_scale_kernel(x_ref, gamma_ref, o_ref):
    # x_ref: (tr, td) tile, gamma_ref: (1, td) resident row, o_ref: (tr, td).
    # Single VPU multiply per vreg; astype is a no-op when dtypes already match.
    o_ref[...] = (x_ref[...] * gamma_ref[...]).astype(o_ref.dtype)


def _default_tiling_params():
    """Tile / VMEM defaults tuned per TPU generation (falls back safely)."""
    tile_bytes = 4 * 1024 * 1024      # v5e / v6e: ~85%+ of roofline already
    vmem_bytes = 32 * 1024 * 1024
    try:
        kind = jax.devices()[0].device_kind.lower()
        if "v7" in kind or "7x" in kind:
            tile_bytes = 8 * 1024 * 1024    # amortize step overhead at 3.2 TB/s
            vmem_bytes = 48 * 1024 * 1024   # headroom under 64 MiB/TC physical
    except Exception:
        pass
    return tile_bytes, vmem_bytes


def layer_scale(
    x: jax.Array,
    gamma: jax.Array,
    *,
    inplace: bool = False,
    target_tile_bytes: int | None = None,
    vmem_limit_bytes: int | None = None,
) -> jax.Array:
    """x: (..., D), gamma: (D,) -> x * gamma with x.dtype, same shape as x."""
    orig_shape = x.shape
    D = orig_shape[-1]
    assert gamma.shape == (D,), f"gamma shape {gamma.shape} != ({D},)"

    auto_tile, auto_vmem = _default_tiling_params()
    target_tile_bytes = target_tile_bytes or auto_tile
    vmem_limit_bytes = vmem_limit_bytes or auto_vmem

    itemsize = jnp.dtype(x.dtype).itemsize
    g_itemsize = jnp.dtype(gamma.dtype).itemsize

    rows = 1
    for s in orig_shape[:-1]:
        rows *= s

    # Keep the multiply in the packed dtype (result dtype is x.dtype anyway).
    # NOTE: if x is bf16 and gamma is f32, PyTorch promotion would give f32;
    # here the module-dtype convention (gamma in x.dtype) is followed.
    g = gamma.astype(x.dtype)

    # ---- Logical 2-D view (rows_eff, L) with zero HBM padding. -------------
    if D % 128 == 0 or D == 0:
        L, fold = D, 1
    else:
        lcm = math.lcm(D, 128)
        fold = lcm // D
        if rows % fold == 0 and lcm <= 65536:
            L = lcm                      # fold channels into lanes (free reshape)
        else:
            L, fold = D, 1               # full-D block is legal; edge stores masked

    rows_eff = (rows * D) // max(L, 1)
    x2 = x.reshape(rows_eff, L)
    g_row = (jnp.tile(g, fold) if fold > 1 else g).reshape(1, L)

    # ---- Channel (lane) tiling: only kicks in for extremely wide L. --------
    # Budget ~ double-buffered x-in + x-out + gamma for a minimum 8-row tile.
    vmem_budget = int(vmem_limit_bytes * 0.75)
    td_max = max(128, (vmem_budget // (4 * 8 * itemsize)) // 128 * 128)
    td = L if L <= td_max else td_max
    grid_d = pl.cdiv(L, td)

    # ---- Row (sublane) tiling: biggest multiple-of-8 tile under target. ----
    tr = max(8, (target_tile_bytes // max(td * itemsize, 1)) // 8 * 8)
    if rows_eff >= 8:
        tr = min(tr, (rows_eff // 8) * 8)
    else:
        tr = max(rows_eff, 1)            # full-extent row block (legal)

    # Guarantee >= 2 grid steps when possible so v7x megacore splits the work.
    if grid_d == 1 and rows_eff >= 16:
        tr = min(tr, max(8, (rows_eff // 2) // 8 * 8))
    grid_r = pl.cdiv(rows_eff, tr)

    out = pl.pallas_call(
        _layer_scale_kernel,
        out_shape=jax.ShapeDtypeStruct((rows_eff, L), x.dtype),
        grid=(grid_r, grid_d),
        in_specs=[
            pl.BlockSpec((tr, td), lambda i, j: (i, j)),
            pl.BlockSpec((1, td), lambda i, j: (0, j)),   # gamma stays resident
        ],
        out_specs=pl.BlockSpec((tr, td), lambda i, j: (i, j)),
        compiler_params=pltpu.CompilerParams(
            dimension_semantics=("parallel", "parallel"),
            vmem_limit_bytes=vmem_limit_bytes,
        ),
        cost_estimate=pl.CostEstimate(
            flops=rows * D,
            transcendentals=0,
            bytes_accessed=2 * rows * D * itemsize + D * g_itemsize,
        ),
        # Closest JAX analogue of PyTorch's inplace x.mul_(gamma): let XLA
        # write the result into x's buffer (true in-place only when x is
        # donated at the surrounding jit boundary).
        input_output_aliases=({0: 0} if inplace else {}),
    )(x2, g_row)

    return out.reshape(orig_shape)


if __name__ == "__main__":
    key = jax.random.PRNGKey(0)
    init_values = 1e-05

    # Case 1: small hidden dim (D=32) -> exercises the channel->lane folding
    # path (L=128, fold=4). Matches nn.Parameter(init_values * ones(dim)).
    B, S, D = 2, 8, 32
    gamma = init_values * jnp.ones((D,), dtype=jnp.float32)
    x = jax.random.normal(key, (B, S, D), dtype=jnp.float32)
    y = jax.block_until_ready(layer_scale(x, gamma))
    assert y.shape == x.shape and y.dtype == x.dtype
    assert jnp.allclose(y, x * gamma, atol=1e-6, rtol=1e-6)

    # Case 2: ragged row count (3*7=21 rows), lane-dense D=256 -> exercises
    # automatic edge masking with no wrapper padding.
    key2 = jax.random.PRNGKey(0)
    D2 = 256
    gamma2 = init_values * jnp.ones((D2,), dtype=jnp.float32)
    x2 = jax.random.normal(key2, (3, 7, D2), dtype=jnp.float32)
    y2 = jax.block_until_ready(layer_scale(x2, gamma2))
    assert jnp.allclose(y2, x2 * gamma2, atol=1e-6, rtol=1e-6)

    # Case 3: "inplace" path via input_output_aliases (PyTorch x.mul_ analogue).
    y3 = jax.block_until_ready(layer_scale(x, gamma, inplace=True))
    assert jnp.allclose(y3, x * gamma, atol=1e-6, rtol=1e-6)

    # TODO(synk): true in-place mutation (PyTorch inplace=True) requires buffer
    # donation at a jit boundary; JAX arrays themselves are immutable.

    print("KERNEL_OK")
</pallas_src>

<mosaic_0001>
module attributes {stable_mosaic.version = 11 : i64} {
  func.func @_layer_scale_kernel(%arg0: i32, %arg1: i32, %arg2: memref<4x128xf32, #tpu.memory_space<vmem>>, %arg3: memref<1x128xf32, #tpu.memory_space<vmem>>, %arg4: memref<4x128xf32, #tpu.memory_space<vmem>>) attributes {dimension_semantics = [#tpu.dimension_semantics<parallel>, #tpu.dimension_semantics<parallel>], iteration_bounds = array<i64: 1, 1>, scalar_prefetch = 0 : i64, scratch_operands = 0 : i64, tpu.core_type = #tpu.core_type<tc>, window_params = [{transform_indices = @transform_0, window_bounds = array<i64: 4, 128>}, {transform_indices = @transform_1, window_bounds = array<i64: 1, 128>}, {transform_indices = @transform_2, window_bounds = array<i64: 4, 128>}]} {
    %c0 = arith.constant 0 : index
    %c0_0 = arith.constant 0 : index
    %0 = vector.load %arg2[%c0, %c0_0] : memref<4x128xf32, #tpu.memory_space<vmem>>, vector<4x128xf32>
    %c0_1 = arith.constant 0 : index
    %c0_2 = arith.constant 0 : index
    %1 = vector.load %arg3[%c0_1, %c0_2] : memref<1x128xf32, #tpu.memory_space<vmem>>, vector<1x128xf32>
    %2 = vector.broadcast %1 : vector<1x128xf32> to vector<4x128xf32>
    %3 = arith.mulf %0, %2 : vector<4x128xf32>
    %c0_3 = arith.constant 0 : index
    %c0_4 = arith.constant 0 : index
    %4 = vector.load %arg4[%c0_3, %c0_4] : memref<4x128xf32, #tpu.memory_space<vmem>>, vector<4x128xf32>
    tpu.vector_store %arg4[%c0_3, %c0_4], %3 {strides = array<i32>} : memref<4x128xf32, #tpu.memory_space<vmem>>, vector<4x128xf32>,
    return
  }
  func.func @transform_0(%arg0: i32, %arg1: i32) -> (i32, i32) {
    %c0_i32 = arith.constant 0 : i32
    return %arg0, %arg1 : i32, i32
  }
  func.func @transform_1(%arg0: i32, %arg1: i32) -> (i32, i32) {
    %c0_i32 = arith.constant 0 : i32
    %c0_i32_0 = arith.constant 0 : i32
    return %c0_i32, %arg1 : i32, i32
  }
  func.func @transform_2(%arg0: i32, %arg1: i32) -> (i32, i32) {
    %c0_i32 = arith.constant 0 : i32
    return %arg0, %arg1 : i32, i32
  }
}

</mosaic_0001>

<llo_original>
// kernel: tpu_custom_call.1
$region0: #{tpu_custom_call.1}
  #allocation0 [shape = 'u32[]', space=smem, size = 0x4, offset = 0x4, fixed_abs, tag = 'smem constant byte address 0x4 - core index']
  #allocation1 [shape = 'u32[144,128]{1,0:T(1,128)}', space=vmem, size = 0x12000, scoped, tag = 'internal scratch']
  %s0 = inlined_call_operand.hbm [shape: f32[4,128], index: 0, kind: input, shape index: {}]
  %s1 = inlined_call_operand.vmem [shape: f32[1,128], index: 1, kind: input, shape index: {}]
  %s2 = inlined_call_operand.hbm [shape: f32[4,128], index: 2, kind: output, shape index: {}]
  %s3 = sld [smem:[#allocation0]]
  $region22: #{tpu_custom_call.1} parent=0
    _
  %s5 = ssub.s32 1, %s3
  %s6 = scalar_select 0, %s5, %s3
  $region1: #{tpu_custom_call.1} parent=0
    #allocation2 [shape = 'u8[2048]{0}', space=vmem, size = 0x800, scoped, tag = 'input window, operand 0, single buffered']
    #allocation3 [shape = 's32[1]{0}', space=sflag, size = 0x4, scoped, tag = 'scoped memory for tpu_custom_call.1']
    #allocation4 [shape = 's32[1]{0}', space=sflag, size = 0x4, scoped, tag = 'scoped memory for tpu_custom_call.1']
    #allocation5 [shape = 'u8[2048]{0}', space=vmem, size = 0x800, scoped, tag = 'output window, operand 0, single buffered']
    %7 = vsyncpa [#allocation3], 0
    %8 = vsyncpa [#allocation4], 0
    // Predicated region
    $region2: #{tpu_custom_call.1} parent=1 // pred_check
      _
    $region3: #{tpu_custom_call.1} parent=1 // pred_check_branch
      %10 = sbr.rel (0) target = $region5
    $region4: #{tpu_custom_call.1} parent=1 // pred_region
      %s12 = ssub.s32 64, 64
      %13 = vsyncadd [#allocation3], %s12
      %s15 = sshll.u32 [#allocation2], 4
      %s16 = int_to_ptr.vmem [resolvable:$true] %s15
      %18 = dma.hbm_to_vmem [thread:$0]  %s0, 64, %s16, [#allocation3]
    $region5: #{tpu_custom_call.1} parent=1 // pred_fallthru
      _
    // Predicated region
    $region6: #{tpu_custom_call.1} parent=1 // pred_check
      _
    $region7: #{tpu_custom_call.1} parent=1 // pred_check_branch
      %20 = sbr.rel (0) target = $region9
    $region8: #{tpu_custom_call.1} parent=1 // pred_region
      _
    $region9: #{tpu_custom_call.1} parent=1 // pred_fallthru
      _
    // Predicated region
    $region10: #{tpu_custom_call.1} parent=1 // pred_check
      _
    $region11: #{tpu_custom_call.1} parent=1 // pred_check_branch
      %22 = sbr.rel (0) target = $region13
    $region12: #{tpu_custom_call.1} parent=1 // pred_region
      %23 = dma.done [#allocation3], 64
    $region13: #{tpu_custom_call.1} parent=1 // pred_fallthru
      _
    %v24 = vld [vmem:[#allocation2] sm:$0xf]
    %v25 = vld [vmem:[%s1] sm:$0x1]
    %v27 = vlaneseq
    %v28 = vshrl.u32 %v27, 7
    %v29 = vsub.s32 0, %v28
    %v30 = vrot.slane %v25, %v29
    %v32 = vmul.f32 %v24, %v30
    %33 = vst [vmem:[#allocation5] sm:$0xf] %v32
    // Predicated region
    $region14: #{tpu_custom_call.1} parent=1 // pred_check
      _
    $region15: #{tpu_custom_call.1} parent=1 // pred_check_branch
      %35 = sbr.rel (0) target = $region17
    $region16: #{tpu_custom_call.1} parent=1 // pred_region
      %s37 = ssub.s32 64, 64
      %38 = vsyncadd [#allocation4], %s37
      %s40 = sshll.u32 [#allocation5], 4
      %s41 = int_to_ptr.vmem [resolvable:$true] %s40
      %43 = dma.vmem_to_hbm [thread:$0]  %s41, 64, %s2, [#allocation4]
    $region17: #{tpu_custom_call.1} parent=1 // pred_fallthru
      _
    // Predicated region
    $region18: #{tpu_custom_call.1} parent=1 // pred_check
      _
    $region19: #{tpu_custom_call.1} parent=1 // pred_check_branch
      %45 = sbr.rel (0) target = $region21
    $region20: #{tpu_custom_call.1} parent=1 // pred_region
      %46 = dma.done [#allocation4], 64
    $region21: #{tpu_custom_call.1} parent=1 // pred_fallthru
      _
    %47 = vsyncpa [#allocation3], 1
    %48 = vsyncpa [#allocation4], 1

</llo_original>
